<compile_context>
chip_gen: v5e
topology: v5e:2x2
jax: 0.10.0
libtpu: 0.0.40
codegen_flags: <defaults>
</compile_context>

<pallas_src>
import functools

import jax
import jax.numpy as jnp
from jax import lax
from jax.experimental import pallas as pl
from jax.experimental.pallas import tpu as pltpu


def _round_up(x, m):
    return ((x + m - 1) // m) * m


def _ce_kernel(logit_ref, t_ref, loss_ref, *, exp_in_bf16):
    """Per-sample cross entropy with ignore_index=-1 for one (TILE_N, C) tile.

    logit_ref: (TILE_N, C) in native dtype (bf16/f32), upcast on load.
    t_ref:     (1, TILE_N) int32, lane-dense.
    loss_ref:  (1, TILE_N) f32,  lane-dense.
    """
    x = logit_ref[...].astype(jnp.float32)                  # (T, C)
    tile_n = x.shape[0]

    # Labels arrive lane-dense (1, T); bring them to the sublane axis for the
    # per-row class compare (tiny relayout, negligible vs the (T, C) work).
    t_col = t_ref[...].reshape(tile_n, 1)                   # (T, 1) int32

    # Numerically stable log-sum-exp over the class (lane) axis.
    m = jnp.max(x, axis=-1, keepdims=True)                  # (T, 1)
    z = x - m                                               # <= 0
    if exp_in_bf16:
        # v6e/v7x: EUP bf16 exp at ~2x the f32 rate; z <= 0 keeps it safe.
        e = jnp.exp(z.astype(jnp.bfloat16)).astype(jnp.float32)
    else:
        e = jnp.exp(z)
    lse = jnp.log(jnp.sum(e, axis=-1, keepdims=True))       # (T, 1)

    # Gather z at the target class via an iota one-hot (t == -1 never matches).
    col = lax.broadcasted_iota(jnp.int32, x.shape, 1)        # (T, C)
    z_t = jnp.sum(jnp.where(col == t_col, z, 0.0),
                  axis=-1, keepdims=True)                    # (T, 1)

    loss_col = jnp.where(t_col != -1, lse - z_t, 0.0)        # (T, 1)
    # Lane-dense store: sample index on the lane (last) axis.
    loss_ref[...] = loss_col.reshape(1, tile_n)              # (1, T)


def per_sample_cross_entropy(logit, t, *, exp_in_bf16=False):
    """logit: (N, C) float (any dtype); t: (N,) int, ignore_index=-1 -> (N,) f32."""
    n, c = logit.shape
    itemsize = jnp.dtype(logit.dtype).itemsize

    # Pad the batch to a multiple of 128 so the lane-dense label/loss blocks
    # are 128-aligned; padded rows get label -1 (=> loss 0) and are sliced off.
    n_pad = _round_up(max(n, 1), 128)

    # Largest tile (multiple of 128, dividing n_pad) under a ~16 MiB/buffer
    # VMEM budget; double-buffered this stays well inside v7x's 64 MiB VMEM.
    row_cap = max(128, ((16 * 1024 * 1024) // (c * itemsize)) // 128 * 128)
    tile_n = 128
    for cand in (1024, 512, 256):
        if cand <= row_cap and n_pad % cand == 0:
            tile_n = cand
            break
    grid = (n_pad // tile_n,)

    if n_pad != n:
        logit = jnp.pad(logit, ((0, n_pad - n), (0, 0)))
        t = jnp.pad(t, (0, n_pad - n), constant_values=-1)
    t_row = t.reshape(1, n_pad).astype(jnp.int32)

    # TODO(synk): for very large class counts (C * itemsize >~ 128 KiB/row) the
    # class axis should also be tiled with an online logsumexp accumulator.
    tile_bytes = tile_n * c * itemsize
    vmem_limit = int(max(32 * 1024 * 1024, 2 * tile_bytes + 4 * 1024 * 1024))

    kernel = functools.partial(_ce_kernel, exp_in_bf16=exp_in_bf16)
    out = pl.pallas_call(
        kernel,
        out_shape=jax.ShapeDtypeStruct((1, n_pad), jnp.float32),
        grid=grid,
        in_specs=[
            pl.BlockSpec((tile_n, c), lambda i: (i, 0)),   # logits tile (native dtype)
            pl.BlockSpec((1, tile_n), lambda i: (0, i)),   # labels, lane-dense
        ],
        out_specs=pl.BlockSpec((1, tile_n), lambda i: (0, i)),
        compiler_params=pltpu.CompilerParams(
            dimension_semantics=("parallel",),
            vmem_limit_bytes=vmem_limit,
        ),
    )(logit, t_row)
    return out[0, :n]


def ohem_cross_entropy_loss(logit, t, rate=0.7, *, exp_in_bf16=False):
    """Matches OHEMCrossEntropyLoss.forward: top-k(int(rate*N)) of per-sample CE, then mean."""
    n = logit.shape[0]
    loss = per_sample_cross_entropy(logit, t, exp_in_bf16=exp_in_bf16)  # Pallas hot path
    k = max(1, int(rate * n))  # clamp avoids NaN mean when int(rate*N) == 0
    # TODO(synk): top-k + mean over the (N,) loss vector remain plain-JAX glue.
    top, _ = lax.top_k(loss, k)
    return jnp.mean(top)


def _reference(logit, t, rate=0.7):
    """Pure-JAX reference of the PyTorch forward for verification."""
    logit = logit.astype(jnp.float32)
    logprob = jax.nn.log_softmax(logit, axis=-1)
    n = logit.shape[0]
    safe_t = jnp.where(t == -1, 0, t)
    picked = jnp.take_along_axis(logprob, safe_t[:, None], axis=-1)[:, 0]
    loss = jnp.where(t == -1, 0.0, -picked)
    k = max(1, int(rate * n))
    top, _ = lax.top_k(loss, k)
    return jnp.mean(top)


if __name__ == "__main__":
    key = jax.random.PRNGKey(0)
    k1, k2, k3, k4 = jax.random.split(key, 4)
    rate = 0.7

    # Small test consistent with the module: batch=8, classes=32, f32 logits.
    N, C = 8, 32
    logit = jax.random.normal(k1, (N, C), dtype=jnp.float32)
    t = jax.random.randint(k2, (N,), 0, C, dtype=jnp.int32)
    t = t.at[3].set(-1)                                   # exercise ignore_index=-1
    out = jax.block_until_ready(ohem_cross_entropy_loss(logit, t, rate=rate))
    ref = jax.block_until_ready(_reference(logit, t, rate=rate))
    assert jnp.allclose(out, ref, atol=1e-5, rtol=1e-5), (out, ref)

    # Multi-tile grid + batch padding + native bf16 logits (no f32 HBM copy).
    N2, C2 = 300, 19
    logit2 = jax.random.normal(k3, (N2, C2), dtype=jnp.float32).astype(jnp.bfloat16)
    t2 = jax.random.randint(k4, (N2,), -1, C2, dtype=jnp.int32)  # includes -1s
    out2 = jax.block_until_ready(ohem_cross_entropy_loss(logit2, t2, rate=rate))
    ref2 = jax.block_until_ready(_reference(logit2.astype(jnp.float32), t2, rate=rate))
    assert jnp.allclose(out2, ref2, atol=1e-3, rtol=1e-3), (out2, ref2)

    print("KERNEL_OK")
</pallas_src>

<mosaic_0001>
module attributes {stable_mosaic.version = 11 : i64} {
  func.func @_ce_kernel(%arg0: i32, %arg1: memref<128x32xf32, #tpu.memory_space<vmem>>, %arg2: memref<1x128xi32, #tpu.memory_space<vmem>>, %arg3: memref<1x128xf32, #tpu.memory_space<vmem>>) attributes {dimension_semantics = [#tpu.dimension_semantics<parallel>], iteration_bounds = array<i64: 1>, scalar_prefetch = 0 : i64, scratch_operands = 0 : i64, tpu.core_type = #tpu.core_type<tc>, window_params = [{transform_indices = @transform_0, window_bounds = array<i64: 128, 32>}, {transform_indices = @transform_1, window_bounds = array<i64: 1, 128>}, {transform_indices = @transform_2, window_bounds = array<i64: 1, 128>}]} {
    %c0 = arith.constant 0 : index
    %c0_0 = arith.constant 0 : index
    %0 = vector.load %arg1[%c0, %c0_0] : memref<128x32xf32, #tpu.memory_space<vmem>>, vector<128x32xf32>
    %c0_1 = arith.constant 0 : index
    %c0_2 = arith.constant 0 : index
    %1 = vector.load %arg2[%c0_1, %c0_2] : memref<1x128xi32, #tpu.memory_space<vmem>>, vector<1x128xi32>
    %2 = vector.shape_cast %1 : vector<1x128xi32> to vector<128x1xi32>
    %cst = arith.constant dense<0xFF800000> : vector<128xf32>
    %3 = vector.multi_reduction <maximumf>, %0, %cst [1] : vector<128x32xf32> to vector<128xf32>
    %4 = vector.shape_cast %3 : vector<128xf32> to vector<128x1xf32>
    %5 = vector.broadcast %4 : vector<128x1xf32> to vector<128x32xf32>
    %6 = arith.subf %0, %5 : vector<128x32xf32>
    %7 = math.exp %6 : vector<128x32xf32>
    %cst_3 = arith.constant dense<0.000000e+00> : vector<128xf32>
    %8 = vector.multi_reduction <add>, %7, %cst_3 [1] : vector<128x32xf32> to vector<128xf32>
    %9 = vector.shape_cast %8 : vector<128xf32> to vector<128x1xf32>
    %10 = math.log %9 : vector<128x1xf32>
    %11 = tpu.iota {dimensions = array<i32: 1>} : vector<128x32xi32>
    %12 = vector.broadcast %2 : vector<128x1xi32> to vector<128x32xi32>
    %13 = arith.cmpi eq, %11, %12 : vector<128x32xi32>
    %cst_4 = arith.constant 0.000000e+00 : f32
    %14 = vector.broadcast %cst_4 : f32 to vector<128x32xf32>
    %15 = arith.select %13, %6, %14 : vector<128x32xi1>, vector<128x32xf32>
    %cst_5 = arith.constant dense<0.000000e+00> : vector<128xf32>
    %16 = vector.multi_reduction <add>, %15, %cst_5 [1] : vector<128x32xf32> to vector<128xf32>
    %17 = vector.shape_cast %16 : vector<128xf32> to vector<128x1xf32>
    %c-1_i32 = arith.constant -1 : i32
    %18 = vector.broadcast %c-1_i32 : i32 to vector<128x1xi32>
    %19 = arith.cmpi ne, %2, %18 : vector<128x1xi32>
    %20 = arith.subf %10, %17 : vector<128x1xf32>
    %cst_6 = arith.constant 0.000000e+00 : f32
    %21 = vector.broadcast %cst_6 : f32 to vector<128x1xf32>
    %22 = arith.select %19, %20, %21 : vector<128x1xi1>, vector<128x1xf32>
    %23 = vector.shape_cast %22 : vector<128x1xf32> to vector<1x128xf32>
    %c0_7 = arith.constant 0 : index
    %c0_8 = arith.constant 0 : index
    %24 = vector.load %arg3[%c0_7, %c0_8] : memref<1x128xf32, #tpu.memory_space<vmem>>, vector<1x128xf32>
    tpu.vector_store %arg3[%c0_7, %c0_8], %23 {strides = array<i32>} : memref<1x128xf32, #tpu.memory_space<vmem>>, vector<1x128xf32>,
    return
  }
  func.func @transform_0(%arg0: i32) -> (i32, i32) {
    %c0_i32 = arith.constant 0 : i32
    %c0_i32_0 = arith.constant 0 : i32
    return %arg0, %c0_i32 : i32, i32
  }
  func.func @transform_1(%arg0: i32) -> (i32, i32) {
    %c0_i32 = arith.constant 0 : i32
    %c0_i32_0 = arith.constant 0 : i32
    return %c0_i32, %arg0 : i32, i32
  }
  func.func @transform_2(%arg0: i32) -> (i32, i32) {
    %c0_i32 = arith.constant 0 : i32
    %c0_i32_0 = arith.constant 0 : i32
    return %c0_i32, %arg0 : i32, i32
  }
}

</mosaic_0001>

<llo_original>
// kernel: tpu_custom_call.1
$region0: #{tpu_custom_call.1}
  #allocation0 [shape = 'u32[]', space=smem, size = 0x4, offset = 0x4, fixed_abs, tag = 'smem constant byte address 0x4 - core index']
  #allocation1 [shape = 'u32[72,128]{1,0:T(1,128)}', space=vmem, size = 0x9000, scoped, tag = 'internal scratch']
  %s0 = inlined_call_operand.vmem [shape: f32[128,32], index: 0, kind: input, shape index: {}]
  %s1 = inlined_call_operand.vmem [shape: s32[1,128], index: 1, kind: input, shape index: {}]
  %s2 = inlined_call_operand.hbm [shape: f32[1,128], index: 2, kind: output, shape index: {}]
  %s3 = sld [smem:[#allocation0]]
  $region18: #{tpu_custom_call.1} parent=0
    _
  %s5 = ssub.s32 1, %s3
  %s6 = scalar_select 0, %s5, %s3
  $region1: #{tpu_custom_call.1} parent=0
    #allocation2 [shape = 'u8[512]{0}', space=vmem, size = 0x400, scoped, tag = 'output window, operand 0, single buffered']
    #allocation3 [shape = 's32[1]{0}', space=sflag, size = 0x4, scoped, tag = 'scoped memory for tpu_custom_call.1']
    %7 = vsyncpa [#allocation3], 0
    // Predicated region
    $region2: #{tpu_custom_call.1} parent=1 // pred_check
      _
    $region3: #{tpu_custom_call.1} parent=1 // pred_check_branch
      %9 = sbr.rel (0) target = $region5
    $region4: #{tpu_custom_call.1} parent=1 // pred_region
      _
    $region5: #{tpu_custom_call.1} parent=1 // pred_fallthru
      _
    // Predicated region
    $region6: #{tpu_custom_call.1} parent=1 // pred_check
      _
    $region7: #{tpu_custom_call.1} parent=1 // pred_check_branch
      %11 = sbr.rel (0) target = $region9
    $region8: #{tpu_custom_call.1} parent=1 // pred_region
      _
    $region9: #{tpu_custom_call.1} parent=1 // pred_fallthru
      _
    %v12 = vld [vmem:[%s0] sm:$0xff]
    %v13 = vld [vmem:[%s0 + $0x8] sm:$0xff]
    %v14 = vld [vmem:[%s0 + $0x10] sm:$0xff]
    %v15 = vld [vmem:[%s0 + $0x18] sm:$0xff]
    %v16 = vld [vmem:[%s0 + $0x20] sm:$0xff]
    %v17 = vld [vmem:[%s0 + $0x28] sm:$0xff]
    %v18 = vld [vmem:[%s0 + $0x30] sm:$0xff]
    %v19 = vld [vmem:[%s0 + $0x38] sm:$0xff]
    %v20 = vld [vmem:[%s0 + $0x40] sm:$0xff]
    %v21 = vld [vmem:[%s0 + $0x48] sm:$0xff]
    %v22 = vld [vmem:[%s0 + $0x50] sm:$0xff]
    %v23 = vld [vmem:[%s0 + $0x58] sm:$0xff]
    %v24 = vld [vmem:[%s0 + $0x60] sm:$0xff]
    %v25 = vld [vmem:[%s0 + $0x68] sm:$0xff]
    %v26 = vld [vmem:[%s0 + $0x70] sm:$0xff]
    %v27 = vld [vmem:[%s0 + $0x78] sm:$0xff]
    %v28 = vld [vmem:[%s1] sm:$0x1]
    %v29 = vperm.slane %v28, 0
    %v30 = vlaneseq
    %v31 = vshrl.u32 %v30, 7
    %33 = vset.pattern.permute.xlu0 %v31
    %34 = vperm.xlu0 %33, %v29
    %v35 = vpop.permute.xlu0 %34
    %v36 = vlaneseq
    %v37 = vshrl.u32 %v36, 7
    %v38 = vadd.s32 %v37, 8
    %39 = vset.pattern.permute.xlu0 %v38
    %40 = vperm.xlu0 %39, %v29
    %v41 = vpop.permute.xlu0 %40
    %v42 = vlaneseq
    %v43 = vshrl.u32 %v42, 7
    %v44 = vadd.s32 %v43, 16
    %45 = vset.pattern.permute.xlu0 %v44
    %46 = vperm.xlu0 %45, %v29
    %v47 = vpop.permute.xlu0 %46
    %v48 = vlaneseq
    %v49 = vshrl.u32 %v48, 7
    %v50 = vadd.s32 %v49, 24
    %51 = vset.pattern.permute.xlu0 %v50
    %52 = vperm.xlu0 %51, %v29
    %v53 = vpop.permute.xlu0 %52
    %v54 = vlaneseq
    %v55 = vshrl.u32 %v54, 7
    %v56 = vadd.s32 %v55, 32
    %57 = vset.pattern.permute.xlu0 %v56
    %58 = vperm.xlu0 %57, %v29
    %v59 = vpop.permute.xlu0 %58
    %v60 = vlaneseq
    %v61 = vshrl.u32 %v60, 7
    %v62 = vadd.s32 %v61, 40
    %63 = vset.pattern.permute.xlu0 %v62
    %64 = vperm.xlu0 %63, %v29
    %v65 = vpop.permute.xlu0 %64
    %v66 = vlaneseq
    %v67 = vshrl.u32 %v66, 7
    %v68 = vadd.s32 %v67, 48
    %69 = vset.pattern.permute.xlu0 %v68
    %70 = vperm.xlu0 %69, %v29
    %v71 = vpop.permute.xlu0 %70
    %v72 = vlaneseq
    %v73 = vshrl.u32 %v72, 7
    %v74 = vadd.s32 %v73, 56
    %75 = vset.pattern.permute.xlu0 %v74
    %76 = vperm.xlu0 %75, %v29
    %v77 = vpop.permute.xlu0 %76
    %v78 = vlaneseq
    %v79 = vshrl.u32 %v78, 7
    %v80 = vadd.s32 %v79, 64
    %81 = vset.pattern.permute.xlu0 %v80
    %82 = vperm.xlu0 %81, %v29
    %v83 = vpop.permute.xlu0 %82
    %v84 = vlaneseq
    %v85 = vshrl.u32 %v84, 7
    %v86 = vadd.s32 %v85, 72
    %87 = vset.pattern.permute.xlu0 %v86
    %88 = vperm.xlu0 %87, %v29
    %v89 = vpop.permute.xlu0 %88
    %v90 = vlaneseq
    %v91 = vshrl.u32 %v90, 7
    %v92 = vadd.s32 %v91, 80
    %93 = vset.pattern.permute.xlu0 %v92
    %94 = vperm.xlu0 %93, %v29
    %v95 = vpop.permute.xlu0 %94
    %v96 = vlaneseq
    %v97 = vshrl.u32 %v96, 7
    %v98 = vadd.s32 %v97, 88
    %99 = vset.pattern.permute.xlu0 %v98
    %100 = vperm.xlu0 %99, %v29
    %v101 = vpop.permute.xlu0 %100
    %v102 = vlaneseq
    %v103 = vshrl.u32 %v102, 7
    %v104 = vadd.s32 %v103, 96
    %105 = vset.pattern.permute.xlu0 %v104
    %106 = vperm.xlu0 %105, %v29
    %v107 = vpop.permute.xlu0 %106
    %v108 = vlaneseq
    %v109 = vshrl.u32 %v108, 7
    %v110 = vadd.s32 %v109, 104
    %111 = vset.pattern.permute.xlu0 %v110
    %112 = vperm.xlu0 %111, %v29
    %v113 = vpop.permute.xlu0 %112
    %v114 = vlaneseq
    %v115 = vshrl.u32 %v114, 7
    %v116 = vadd.s32 %v115, 112
    %117 = vset.pattern.permute.xlu0 %v116
    %118 = vperm.xlu0 %117, %v29
    %v119 = vpop.permute.xlu0 %118
    %v120 = vlaneseq
    %v121 = vshrl.u32 %v120, 7
    %v122 = vadd.s32 %v121, 120
    %123 = vset.pattern.permute.xlu0 %v122
    %124 = vperm.xlu0 %123, %v29
    %v125 = vpop.permute.xlu0 %124
    %vm126 = vcmask 261120
    %v127 = vsel %vm126, %v12, -inf
    %128 = vmax.xlane.f32.xlu0 %v127
    %v129 = vpop.xlane.xlu0 %128
    %v130 = vsel %vm126, %v13, -inf
    %131 = vmax.xlane.f32.xlu0 %v130
    %v132 = vpop.xlane.xlu0 %131
    %v133 = vsel %vm126, %v14, -inf
    %134 = vmax.xlane.f32.xlu0 %v133
    %v135 = vpop.xlane.xlu0 %134
    %v136 = vsel %vm126, %v15, -inf
    %137 = vmax.xlane.f32.xlu0 %v136
    %v138 = vpop.xlane.xlu0 %137
    %v139 = vsel %vm126, %v16, -inf
    %140 = vmax.xlane.f32.xlu0 %v139
    %v141 = vpop.xlane.xlu0 %140
    %v142 = vsel %vm126, %v17, -inf
    %143 = vmax.xlane.f32.xlu0 %v142
    %v144 = vpop.xlane.xlu0 %143
    %v145 = vsel %vm126, %v18, -inf
    %146 = vmax.xlane.f32.xlu0 %v145
    %v147 = vpop.xlane.xlu0 %146
    %v148 = vsel %vm126, %v19, -inf
    %149 = vmax.xlane.f32.xlu0 %v148
    %v150 = vpop.xlane.xlu0 %149
    %v151 = vsel %vm126, %v20, -inf
    %152 = vmax.xlane.f32.xlu0 %v151
    %v153 = vpop.xlane.xlu0 %152
    %v154 = vsel %vm126, %v21, -inf
    %155 = vmax.xlane.f32.xlu0 %v154
    %v156 = vpop.xlane.xlu0 %155
    %v157 = vsel %vm126, %v22, -inf
    %158 = vmax.xlane.f32.xlu0 %v157
    %v159 = vpop.xlane.xlu0 %158
    %v160 = vsel %vm126, %v23, -inf
    %161 = vmax.xlane.f32.xlu0 %v160
    %v162 = vpop.xlane.xlu0 %161
    %v163 = vsel %vm126, %v24, -inf
    %164 = vmax.xlane.f32.xlu0 %v163
    %v165 = vpop.xlane.xlu0 %164
    %v166 = vsel %vm126, %v25, -inf
    %167 = vmax.xlane.f32.xlu0 %v166
    %v168 = vpop.xlane.xlu0 %167
    %v169 = vsel %vm126, %v26, -inf
    %170 = vmax.xlane.f32.xlu0 %v169
    %v171 = vpop.xlane.xlu0 %170
    %v172 = vsel %vm126, %v27, -inf
    %173 = vmax.xlane.f32.xlu0 %v172
    %v174 = vpop.xlane.xlu0 %173
    %v175 = vsub.f32 %v12, %v129
    %v176 = vsub.f32 %v13, %v132
    %v177 = vsub.f32 %v14, %v135
    %v178 = vsub.f32 %v15, %v138
    %v179 = vsub.f32 %v16, %v141
    %v180 = vsub.f32 %v17, %v144
    %v181 = vsub.f32 %v18, %v147
    %v182 = vsub.f32 %v19, %v150
    %v183 = vsub.f32 %v20, %v153
    %v184 = vsub.f32 %v21, %v156
    %v185 = vsub.f32 %v22, %v159
    %v186 = vsub.f32 %v23, %v162
    %v187 = vsub.f32 %v24, %v165
    %v188 = vsub.f32 %v25, %v168
    %v189 = vsub.f32 %v26, %v171
    %v190 = vsub.f32 %v27, %v174
    %v191 = vmul.f32 %v175, 1.442695
    %v192 = vpow.pop %v191
    %v193 = vmul.f32 %v176, 1.442695
    %v194 = vpow.pop %v193
    %v195 = vmul.f32 %v177, 1.442695
    %v196 = vpow.pop %v195
    %v197 = vmul.f32 %v178, 1.442695
    %v198 = vpow.pop %v197
    %v199 = vmul.f32 %v179, 1.442695
    %v200 = vpow.pop %v199
    %v201 = vmul.f32 %v180, 1.442695
    %v202 = vpow.pop %v201
    %v203 = vmul.f32 %v181, 1.442695
    %v204 = vpow.pop %v203
    %v205 = vmul.f32 %v182, 1.442695
    %v206 = vpow.pop %v205
    %v207 = vmul.f32 %v183, 1.442695
    %v208 = vpow.pop %v207
    %v209 = vmul.f32 %v184, 1.442695
    %v210 = vpow.pop %v209
    %v211 = vmul.f32 %v185, 1.442695
    %v212 = vpow.pop %v211
    %v213 = vmul.f32 %v186, 1.442695
    %v214 = vpow.pop %v213
    %v215 = vmul.f32 %v187, 1.442695
    %v216 = vpow.pop %v215
    %v217 = vmul.f32 %v188, 1.442695
    %v218 = vpow.pop %v217
    %v219 = vmul.f32 %v189, 1.442695
    %v220 = vpow.pop %v219
    %v221 = vmul.f32 %v190, 1.442695
    %v222 = vpow.pop %v221
    %v223 = vsel %vm126, %v192, 0.0
    %224 = vadd.xlane.f32.xlu0 %v223
    %v225 = vpop.xlane.xlu0 %224
    %v226 = vsel %vm126, %v194, 0.0
    %227 = vadd.xlane.f32.xlu0 %v226
    %v228 = vpop.xlane.xlu0 %227
    %v229 = vsel %vm126, %v196, 0.0
    %230 = vadd.xlane.f32.xlu0 %v229
    %v231 = vpop.xlane.xlu0 %230
    %v232 = vsel %vm126, %v198, 0.0
    %233 = vadd.xlane.f32.xlu0 %v232
    %v234 = vpop.xlane.xlu0 %233
    %v235 = vsel %vm126, %v200, 0.0
    %236 = vadd.xlane.f32.xlu0 %v235
    %v237 = vpop.xlane.xlu0 %236
    %v238 = vsel %vm126, %v202, 0.0
    %239 = vadd.xlane.f32.xlu0 %v238
    %v240 = vpop.xlane.xlu0 %239
    %v241 = vsel %vm126, %v204, 0.0
    %242 = vadd.xlane.f32.xlu0 %v241
    %v243 = vpop.xlane.xlu0 %242
    %v244 = vsel %vm126, %v206, 0.0
    %245 = vadd.xlane.f32.xlu0 %v244
    %v246 = vpop.xlane.xlu0 %245
    %v247 = vsel %vm126, %v208, 0.0
    %248 = vadd.xlane.f32.xlu0 %v247
    %v249 = vpop.xlane.xlu0 %248
    %v250 = vsel %vm126, %v210, 0.0
    %251 = vadd.xlane.f32.xlu0 %v250
    %v252 = vpop.xlane.xlu0 %251
    %v253 = vsel %vm126, %v212, 0.0
    %254 = vadd.xlane.f32.xlu0 %v253
    %v255 = vpop.xlane.xlu0 %254
    %v256 = vsel %vm126, %v214, 0.0
    %257 = vadd.xlane.f32.xlu0 %v256
    %v258 = vpop.xlane.xlu0 %257
    %v259 = vsel %vm126, %v216, 0.0
    %260 = vadd.xlane.f32.xlu0 %v259
    %v261 = vpop.xlane.xlu0 %260
    %v262 = vsel %vm126, %v218, 0.0
    %263 = vadd.xlane.f32.xlu0 %v262
    %v264 = vpop.xlane.xlu0 %263
    %v265 = vsel %vm126, %v220, 0.0
    %266 = vadd.xlane.f32.xlu0 %v265
    %v267 = vpop.xlane.xlu0 %266
    %v268 = vsel %vm126, %v222, 0.0
    %269 = vadd.xlane.f32.xlu0 %v268
    %v270 = vpop.xlane.xlu0 %269
    %v271 = vlog2.pop %v225
    %v272 = vmul.f32 %v271, 0.6931472
    %v273 = vlog2.pop %v228
    %v274 = vmul.f32 %v273, 0.6931472
    %v275 = vlog2.pop %v231
    %v276 = vmul.f32 %v275, 0.6931472
    %v277 = vlog2.pop %v234
    %v278 = vmul.f32 %v277, 0.6931472
    %v279 = vlog2.pop %v237
    %v280 = vmul.f32 %v279, 0.6931472
    %v281 = vlog2.pop %v240
    %v282 = vmul.f32 %v281, 0.6931472
    %v283 = vlog2.pop %v243
    %v284 = vmul.f32 %v283, 0.6931472
    %v285 = vlog2.pop %v246
    %v286 = vmul.f32 %v285, 0.6931472
    %v287 = vlog2.pop %v249
    %v288 = vmul.f32 %v287, 0.6931472
    %v289 = vlog2.pop %v252
    %v290 = vmul.f32 %v289, 0.6931472
    %v291 = vlog2.pop %v255
    %v292 = vmul.f32 %v291, 0.6931472
    %v293 = vlog2.pop %v258
    %v294 = vmul.f32 %v293, 0.6931472
    %v295 = vlog2.pop %v261
    %v296 = vmul.f32 %v295, 0.6931472
    %v297 = vlog2.pop %v264
    %v298 = vmul.f32 %v297, 0.6931472
    %v299 = vlog2.pop %v267
    %v300 = vmul.f32 %v299, 0.6931472
    %v301 = vlog2.pop %v270
    %v302 = vmul.f32 %v301, 0.6931472
    %v303 = vlaneseq
    %v304 = vand.u32 %v303, 127
    %vm305 = vcmp.eq.s32.totalorder %v304, %v35
    %vm306 = vcmp.eq.s32.totalorder %v304, %v41
    %vm307 = vcmp.eq.s32.totalorder %v304, %v47
    %vm308 = vcmp.eq.s32.totalorder %v304, %v53
    %vm309 = vcmp.eq.s32.totalorder %v304, %v59
    %vm310 = vcmp.eq.s32.totalorder %v304, %v65
    %vm311 = vcmp.eq.s32.totalorder %v304, %v71
    %vm312 = vcmp.eq.s32.totalorder %v304, %v77
    %vm313 = vcmp.eq.s32.totalorder %v304, %v83
    %vm314 = vcmp.eq.s32.totalorder %v304, %v89
    %vm315 = vcmp.eq.s32.totalorder %v304, %v95
    %vm316 = vcmp.eq.s32.totalorder %v304, %v101
    %vm317 = vcmp.eq.s32.totalorder %v304, %v107
    %vm318 = vcmp.eq.s32.totalorder %v304, %v113
    %vm319 = vcmp.eq.s32.totalorder %v304, %v119
    %vm320 = vcmp.eq.s32.totalorder %v304, %v125
    %v321 = vsel %vm305, %v175, 0.0
    %v322 = vsel %vm306, %v176, 0.0
    %v323 = vsel %vm307, %v177, 0.0
    %v324 = vsel %vm308, %v178, 0.0
    %v325 = vsel %vm309, %v179, 0.0
    %v326 = vsel %vm310, %v180, 0.0
    %v327 = vsel %vm311, %v181, 0.0
    %v328 = vsel %vm312, %v182, 0.0
    %v329 = vsel %vm313, %v183, 0.0
    %v330 = vsel %vm314, %v184, 0.0
    %v331 = vsel %vm315, %v185, 0.0
    %v332 = vsel %vm316, %v186, 0.0
    %v333 = vsel %vm317, %v187, 0.0
    %v334 = vsel %vm318, %v188, 0.0
    %v335 = vsel %vm319, %v189, 0.0
    %v336 = vsel %vm320, %v190, 0.0
    %v337 = vsel %vm126, %v321, 0.0
    %338 = vadd.xlane.f32.xlu0 %v337
    %v339 = vpop.xlane.xlu0 %338
    %v340 = vsel %vm126, %v322, 0.0
    %341 = vadd.xlane.f32.xlu0 %v340
    %v342 = vpop.xlane.xlu0 %341
    %v343 = vsel %vm126, %v323, 0.0
    %344 = vadd.xlane.f32.xlu0 %v343
    %v345 = vpop.xlane.xlu0 %344
    %v346 = vsel %vm126, %v324, 0.0
    %347 = vadd.xlane.f32.xlu0 %v346
    %v348 = vpop.xlane.xlu0 %347
    %v349 = vsel %vm126, %v325, 0.0
    %350 = vadd.xlane.f32.xlu0 %v349
    %v351 = vpop.xlane.xlu0 %350
    %v352 = vsel %vm126, %v326, 0.0
    %353 = vadd.xlane.f32.xlu0 %v352
    %v354 = vpop.xlane.xlu0 %353
    %v355 = vsel %vm126, %v327, 0.0
    %356 = vadd.xlane.f32.xlu0 %v355
    %v357 = vpop.xlane.xlu0 %356
    %v358 = vsel %vm126, %v328, 0.0
    %359 = vadd.xlane.f32.xlu0 %v358
    %v360 = vpop.xlane.xlu0 %359
    %v361 = vsel %vm126, %v329, 0.0
    %362 = vadd.xlane.f32.xlu0 %v361
    %v363 = vpop.xlane.xlu0 %362
    %v364 = vsel %vm126, %v330, 0.0
    %365 = vadd.xlane.f32.xlu0 %v364
    %v366 = vpop.xlane.xlu0 %365
    %v367 = vsel %vm126, %v331, 0.0
    %368 = vadd.xlane.f32.xlu0 %v367
    %v369 = vpop.xlane.xlu0 %368
    %v370 = vsel %vm126, %v332, 0.0
    %371 = vadd.xlane.f32.xlu0 %v370
    %v372 = vpop.xlane.xlu0 %371
    %v373 = vsel %vm126, %v333, 0.0
    %374 = vadd.xlane.f32.xlu0 %v373
    %v375 = vpop.xlane.xlu0 %374
    %v376 = vsel %vm126, %v334, 0.0
    %377 = vadd.xlane.f32.xlu0 %v376
    %v378 = vpop.xlane.xlu0 %377
    %v379 = vsel %vm126, %v335, 0.0
    %380 = vadd.xlane.f32.xlu0 %v379
    %v381 = vpop.xlane.xlu0 %380
    %v382 = vsel %vm126, %v336, 0.0
    %383 = vadd.xlane.f32.xlu0 %v382
    %v384 = vpop.xlane.xlu0 %383
    %vm385 = vcmp.ne.s32.totalorder %v35, 4294967295
    %vm386 = vcmp.ne.s32.totalorder %v41, 4294967295
    %vm387 = vcmp.ne.s32.totalorder %v47, 4294967295
    %vm388 = vcmp.ne.s32.totalorder %v53, 4294967295
    %vm389 = vcmp.ne.s32.totalorder %v59, 4294967295
    %vm390 = vcmp.ne.s32.totalorder %v65, 4294967295
    %vm391 = vcmp.ne.s32.totalorder %v71, 4294967295
    %vm392 = vcmp.ne.s32.totalorder %v77, 4294967295
    %vm393 = vcmp.ne.s32.totalorder %v83, 4294967295
    %vm394 = vcmp.ne.s32.totalorder %v89, 4294967295
    %vm395 = vcmp.ne.s32.totalorder %v95, 4294967295
    %vm396 = vcmp.ne.s32.totalorder %v101, 4294967295
    %vm397 = vcmp.ne.s32.totalorder %v107, 4294967295
    %vm398 = vcmp.ne.s32.totalorder %v113, 4294967295
    %vm399 = vcmp.ne.s32.totalorder %v119, 4294967295
    %vm400 = vcmp.ne.s32.totalorder %v125, 4294967295
    %v401 = vsub.f32 %v272, %v339
    %v402 = vsub.f32 %v274, %v342
    %v403 = vsub.f32 %v276, %v345
    %v404 = vsub.f32 %v278, %v348
    %v405 = vsub.f32 %v280, %v351
    %v406 = vsub.f32 %v282, %v354
    %v407 = vsub.f32 %v284, %v357
    %v408 = vsub.f32 %v286, %v360
    %v409 = vsub.f32 %v288, %v363
    %v410 = vsub.f32 %v290, %v366
    %v411 = vsub.f32 %v292, %v369
    %v412 = vsub.f32 %v294, %v372
    %v413 = vsub.f32 %v296, %v375
    %v414 = vsub.f32 %v298, %v378
    %v415 = vsub.f32 %v300, %v381
    %v416 = vsub.f32 %v302, %v384
    %v417 = vsel %vm385, %v401, 0.0
    %v418 = vsel %vm386, %v402, 0.0
    %v419 = vsel %vm387, %v403, 0.0
    %v420 = vsel %vm388, %v404, 0.0
    %v421 = vsel %vm389, %v405, 0.0
    %v422 = vsel %vm390, %v406, 0.0
    %v423 = vsel %vm391, %v407, 0.0
    %v424 = vsel %vm392, %v408, 0.0
    %v425 = vsel %vm393, %v409, 0.0
    %v426 = vsel %vm394, %v410, 0.0
    %v427 = vsel %vm395, %v411, 0.0
    %v428 = vsel %vm396, %v412, 0.0
    %v429 = vsel %vm397, %v413, 0.0
    %v430 = vsel %vm398, %v414, 0.0
    %v431 = vsel %vm399, %v415, 0.0
    %v432 = vsel %vm400, %v416, 0.0
    %v449 = vperm.slane %v417, %v304
    %v450 = vadd.s32 %v304, 4294967288
    %v451 = vperm.slane %v418, %v450
    %vm452 = vcmask 130112
    %v453 = vsel %vm452, %v451, %v449
    %v454 = vadd.s32 %v304, 4294967280
    %v455 = vperm.slane %v419, %v454
    %vm456 = vcmask 195712
    %v457 = vsel %vm456, %v455, %v453
    %v458 = vadd.s32 %v304, 4294967272
    %v459 = vperm.slane %v420, %v458
    %vm460 = vcmask 261312
    %v461 = vsel %vm460, %v459, %v457
    %v462 = vadd.s32 %v304, 4294967264
    %v463 = vperm.slane %v421, %v462
    %vm464 = vcmask 326912
    %v465 = vsel %vm464, %v463, %v461
    %v466 = vadd.s32 %v304, 4294967256
    %v467 = vperm.slane %v422, %v466
    %vm468 = vcmask 392512
    %v469 = vsel %vm468, %v467, %v465
    %v470 = vadd.s32 %v304, 4294967248
    %v471 = vperm.slane %v423, %v470
    %vm472 = vcmask 458112
    %v473 = vsel %vm472, %v471, %v469
    %v474 = vadd.s32 %v304, 4294967240
    %v475 = vperm.slane %v424, %v474
    %vm476 = vcmask 523712
    %v477 = vsel %vm476, %v475, %v473
    %v478 = vadd.s32 %v304, 4294967232
    %v479 = vperm.slane %v425, %v478
    %vm480 = vcmask 589312
    %v481 = vsel %vm480, %v479, %v477
    %v482 = vadd.s32 %v304, 4294967224
    %v483 = vperm.slane %v426, %v482
    %vm484 = vcmask 654912
    %v485 = vsel %vm484, %v483, %v481
    %v486 = vadd.s32 %v304, 4294967216
    %v487 = vperm.slane %v427, %v486
    %vm488 = vcmask 720512
    %v489 = vsel %vm488, %v487, %v485
    %v490 = vadd.s32 %v304, 4294967208
    %v491 = vperm.slane %v428, %v490
    %vm492 = vcmask 786112
    %v493 = vsel %vm492, %v491, %v489
    %v494 = vadd.s32 %v304, 4294967200
    %v495 = vperm.slane %v429, %v494
    %vm496 = vcmask 851712
    %v497 = vsel %vm496, %v495, %v493
    %v498 = vadd.s32 %v304, 4294967192
    %v499 = vperm.slane %v430, %v498
    %vm500 = vcmask 917312
    %v501 = vsel %vm500, %v499, %v497
    %v502 = vadd.s32 %v304, 4294967184
    %v503 = vperm.slane %v431, %v502
    %vm504 = vcmask 982912
    %v505 = vsel %vm504, %v503, %v501
    %v506 = vadd.s32 %v304, 4294967176
    %v507 = vperm.slane %v432, %v506
    %vm508 = vcmask 1048512
    %v509 = vsel %vm508, %v507, %v505
    %511 = vst [vmem:[#allocation2] sm:$0x1] %v509
    // Predicated region
    $region10: #{tpu_custom_call.1} parent=1 // pred_check
      _
    $region11: #{tpu_custom_call.1} parent=1 // pred_check_branch
      %513 = sbr.rel (0) target = $region13
    $region12: #{tpu_custom_call.1} parent=1 // pred_region
      %515 = vsyncadd [#allocation3], 0
      %s517 = sshll.u32 [#allocation2], 4
      %s518 = int_to_ptr.vmem [resolvable:$true] %s517
      %s519 = sshll.u32 %s2, 4
      %s520 = int_to_ptr.hbm [resolvable:$true] %s519
      %522 = dma.vmem_to_hbm [thread:$0]  %s518, 16, %s520, [#allocation3]
    $region13: #{tpu_custom_call.1} parent=1 // pred_fallthru
      _
    // Predicated region
    $region14: #{tpu_custom_call.1} parent=1 // pred_check
      _
    $region15: #{tpu_custom_call.1} parent=1 // pred_check_branch
      %524 = sbr.rel (0) target = $region17
    $region16: #{tpu_custom_call.1} parent=1 // pred_region
      %526 = dma.done [#allocation3], 16
    $region17: #{tpu_custom_call.1} parent=1 // pred_fallthru
      _
    %527 = vsyncpa [#allocation3], 1

</llo_original>
